<compile_context>
chip_gen: v6e
topology: v6e:2x2x1
jax: 0.10.0
libtpu: 0.0.40
codegen_flags: <defaults>
</compile_context>

<pallas_src>
import functools

import jax
import jax.numpy as jnp
from jax import lax
from jax.experimental import pallas as pl
from jax.experimental.pallas import tpu as pltpu


def _linear_kernel_f32_out(x_ref, w_ref, b_ref, o_ref):
    # x_ref: (tile_b, tile_k)  w_ref: (tile_k, tile_n)  b_ref: (1, tile_n) f32
    # o_ref: (tile_b, tile_n) f32 — resident across the K grid axis.
    @pl.when(pl.program_id(2) == 0)
    def _init():
        # Fold the bias add into the first K step (no epilogue pass).
        o_ref[...] = jnp.broadcast_to(b_ref[...], o_ref.shape)

    o_ref[...] += jnp.dot(
        x_ref[...], w_ref[...], preferred_element_type=jnp.float32
    )


def _linear_kernel_scratch(x_ref, w_ref, b_ref, o_ref, acc_ref):
    # Used only when the output dtype is not f32: accumulate in an f32 scratch
    # and cast once on the last K step.
    k = pl.program_id(2)

    @pl.when(k == 0)
    def _init():
        acc_ref[...] = jnp.broadcast_to(b_ref[...], acc_ref.shape)

    acc_ref[...] += jnp.dot(
        x_ref[...], w_ref[...], preferred_element_type=jnp.float32
    )

    @pl.when(k == pl.num_programs(2) - 1)
    def _finalize():
        o_ref[...] = acc_ref[...].astype(o_ref.dtype)


def _round_up(a, m):
    return ((a + m - 1) // m) * m


def _prepare(a, rows, cols, dtype):
    """Cast / pad only if actually needed (avoid gratuitous HBM passes)."""
    if a.dtype != dtype:
        a = a.astype(dtype)
    r, c = a.shape
    if (r, c) != (rows, cols):
        a = jnp.pad(a, ((0, rows - r), (0, cols - c)))
    return a


def _vmem_ceiling_bytes():
    # ~75% of physical VMEM: ~96 MiB on v5e/v6e (128 MiB), ~48 MiB on v7x
    # (64 MiB).  Conservative fallback if the query is unavailable.
    try:
        cap = getattr(pltpu.get_tpu_info(), "vmem_capacity_bytes", 64 << 20)
    except Exception:
        cap = 64 << 20
    return int(cap * 3 // 4)


@functools.partial(
    jax.jit,
    static_argnames=("tile_b", "tile_n", "tile_k", "compute_dtype", "out_dtype"),
)
def linear_map(x, weight, bias, *, tile_b=512, tile_n=512, tile_k=512,
               compute_dtype=None, out_dtype=None):
    """y = x @ weight.T + bias  (PyTorch nn.Linear forward).

    compute_dtype: operand dtype fed to the MXU (f32 accumulation always).
      Default keeps x.dtype (exact nn.Linear numerics for f32 inputs);
      bf16 is an opt-in throughput path that intentionally diverges.
    out_dtype: output dtype (default x.dtype, dtype-preserving like nn.Linear).
    """
    orig_shape = x.shape
    x2d = x if x.ndim == 2 else x.reshape(-1, orig_shape[-1])

    batch, indim = x2d.shape
    outdim, indim_w = weight.shape
    assert indim == indim_w, "weight indim mismatch"

    compute_dtype = jnp.dtype(x.dtype if compute_dtype is None else compute_dtype)
    out_dtype = jnp.dtype(x.dtype if out_dtype is None else out_dtype)
    itemsize = compute_dtype.itemsize
    out_itemsize = out_dtype.itemsize

    # Sublane packing of the compute dtype: 8 rows f32, 16 bf16, 32 int8/fp8.
    sub = max(8, 32 // itemsize)

    # Clamp requested tiles to the (padded) problem size, keep alignment.
    tile_b = _round_up(min(tile_b, _round_up(batch, sub)), sub)
    tile_n = _round_up(min(tile_n, _round_up(outdim, 128)), 128)
    tile_k = _round_up(min(tile_k, _round_up(indim, 128)), 128)

    bp = _round_up(batch, tile_b)
    np_ = _round_up(outdim, tile_n)

    # v7x has 2 TensorCores: if both parallel axes collapse to a single block,
    # split N so both cores get work (x is tiny here, so the extra re-read of
    # x is negligible).  Harmless on single-TC chips.
    if bp // tile_b == 1 and np_ // tile_n == 1 and tile_n % 256 == 0:
        tile_n //= 2
        np_ = _round_up(outdim, tile_n)

    kp = _round_up(indim, tile_k)

    # Prepare operands: cast/pad only when needed; W is pre-transposed so the
    # kernel contracts on canonical (k-major) dims — no in-kernel transpose.
    x_p = _prepare(x2d, bp, kp, compute_dtype)
    w_p = _prepare(weight.T, kp, np_, compute_dtype)
    b_p = _prepare(bias.reshape(1, outdim), 1, np_, jnp.float32)

    grid_m, grid_n, grid_k = bp // tile_b, np_ // tile_n, kp // tile_k
    grid = (grid_m, grid_n, grid_k)

    f32_out = out_dtype == jnp.dtype(jnp.float32)
    kernel = _linear_kernel_f32_out if f32_out else _linear_kernel_scratch
    scratch_shapes = [] if f32_out else [pltpu.VMEM((tile_b, tile_n), jnp.float32)]

    # VMEM budget: double-buffered x/W/bias/out tiles (+ optional f32 scratch),
    # with headroom, capped generation-aware under the physical ceiling.
    tiles_bytes = 2 * (
        tile_b * tile_k * itemsize      # x tile (double-buffered)
        + tile_k * tile_n * itemsize    # W tile (double-buffered)
        + tile_b * tile_n * out_itemsize  # out tile (double-buffered)
        + tile_n * 4                    # bias tile
    )
    if not f32_out:
        tiles_bytes += tile_b * tile_n * 4
    vmem_limit = int(min(max(tiles_bytes * 3 // 2, 16 << 20), _vmem_ceiling_bytes()))

    cost = pl.CostEstimate(
        flops=2 * bp * np_ * kp,
        transcendentals=0,
        bytes_accessed=(
            bp * kp * itemsize * grid_n     # x re-streamed once per N block
            + np_ * kp * itemsize * grid_m  # W re-streamed once per M block
            + np_ * 4 * grid_m              # bias
            + bp * np_ * out_itemsize       # output writeback
        ),
    )

    y_p = pl.pallas_call(
        kernel,
        out_shape=jax.ShapeDtypeStruct((bp, np_), out_dtype),
        grid_spec=pltpu.PrefetchScalarGridSpec(
            num_scalar_prefetch=0,
            grid=grid,
            in_specs=[
                pl.BlockSpec((tile_b, tile_k), lambda i, j, k: (i, k)),  # x
                pl.BlockSpec((tile_k, tile_n), lambda i, j, k: (k, j)),  # W^T
                pl.BlockSpec((1, tile_n), lambda i, j, k: (0, j)),       # bias
            ],
            out_specs=pl.BlockSpec((tile_b, tile_n), lambda i, j, k: (i, j)),
            scratch_shapes=scratch_shapes,
        ),
        compiler_params=pltpu.CompilerParams(
            dimension_semantics=("parallel", "parallel", "arbitrary"),
            vmem_limit_bytes=vmem_limit,
        ),
        cost_estimate=cost,
    )(x_p, w_p, b_p)

    y = y_p[:batch, :outdim]
    if x.ndim != 2:
        y = y.reshape(orig_shape[:-1] + (outdim,))
    return y


if __name__ == "__main__":
    # Small shapes consistent with the module: LinearMap(indim=32, outdim=16)
    # applied to a batch of feature vectors x: [8, 32].
    indim, outdim, batch = 32, 16, 8

    key = jax.random.PRNGKey(0)
    kx, kw, kb = jax.random.split(key, 3)

    # Deterministic init mimicking nn.Linear: U(-1/sqrt(indim), 1/sqrt(indim))
    bound = 1.0 / (indim ** 0.5)
    weight = jax.random.uniform(kw, (outdim, indim), jnp.float32, -bound, bound)
    bias = jax.random.uniform(kb, (outdim,), jnp.float32, -bound, bound)
    x = jax.random.normal(kx, (batch, indim), jnp.float32)

    # Default path: f32 operands, f32 output, no-scratch kernel (exact
    # nn.Linear numerics).
    y = linear_map(x, weight, bias)
    jax.block_until_ready(y)
    y_ref = x @ weight.T + bias
    assert y.shape == (batch, outdim)
    assert y.dtype == x.dtype
    assert jnp.allclose(y, y_ref, atol=1e-5, rtol=1e-5)

    # Larger tiled configuration exercising grid > 1 on every axis, bf16
    # operands (opt-in throughput path) and a bf16 output (scratch-kernel
    # path with f32 accumulation).
    B2, K2, N2 = 512, 384, 512
    k2x, k2w, k2b = jax.random.split(jax.random.PRNGKey(1), 3)
    x2 = jax.random.normal(k2x, (B2, K2), jnp.float32)
    w2 = jax.random.normal(k2w, (N2, K2), jnp.float32) * 0.02
    b2 = jax.random.normal(k2b, (N2,), jnp.float32) * 0.02
    y2 = linear_map(x2, w2, b2, tile_b=256, tile_n=256, tile_k=128,
                    compute_dtype=jnp.bfloat16, out_dtype=jnp.bfloat16)
    jax.block_until_ready(y2)
    y2_ref = x2 @ w2.T + b2
    assert y2.shape == (B2, N2)
    assert y2.dtype == jnp.bfloat16
    assert jnp.allclose(y2.astype(jnp.float32), y2_ref, atol=5e-2, rtol=5e-2)

    print("KERNEL_OK")
</pallas_src>

<mosaic_0001>
module attributes {stable_mosaic.version = 11 : i64} {
  func.func @_linear_kernel_f32_out(%arg0: i32, %arg1: i32, %arg2: i32, %arg3: memref<8x128xf32, #tpu.memory_space<vmem>>, %arg4: memref<128x128xf32, #tpu.memory_space<vmem>>, %arg5: memref<1x128xf32, #tpu.memory_space<vmem>>, %arg6: memref<8x128xf32, #tpu.memory_space<vmem>>) attributes {dimension_semantics = [#tpu.dimension_semantics<parallel>, #tpu.dimension_semantics<parallel>, #tpu.dimension_semantics<arbitrary>], iteration_bounds = array<i64: 1, 1, 1>, scalar_prefetch = 0 : i64, scratch_operands = 0 : i64, tpu.core_type = #tpu.core_type<tc>, window_params = [{transform_indices = @transform_0, window_bounds = array<i64: 8, 128>}, {transform_indices = @transform_1, window_bounds = array<i64: 128, 128>}, {transform_indices = @transform_2, window_bounds = array<i64: 1, 128>}, {transform_indices = @transform_3, window_bounds = array<i64: 8, 128>}]} {
    %c0_i32 = arith.constant 0 : i32
    %0 = arith.cmpi eq, %arg2, %c0_i32 : i32
    %1 = arith.extui %0 : i1 to i32
    %c0_i32_0 = arith.constant 0 : i32
    %2 = arith.cmpi ne, %1, %c0_i32_0 : i32
    scf.if %2 {
      %c0_8 = arith.constant 0 : index
      %c0_9 = arith.constant 0 : index
      %9 = vector.load %arg5[%c0_8, %c0_9] : memref<1x128xf32, #tpu.memory_space<vmem>>, vector<1x128xf32>
      %10 = vector.shape_cast %9 : vector<1x128xf32> to vector<1x128xf32>
      %11 = vector.broadcast %10 : vector<1x128xf32> to vector<8x128xf32>
      %c0_10 = arith.constant 0 : index
      %c0_11 = arith.constant 0 : index
      %12 = vector.load %arg6[%c0_10, %c0_11] : memref<8x128xf32, #tpu.memory_space<vmem>>, vector<8x128xf32>
      tpu.vector_store %arg6[%c0_10, %c0_11], %11 {strides = array<i32>} : memref<8x128xf32, #tpu.memory_space<vmem>>, vector<8x128xf32>,
    } else {
    }
    %c0 = arith.constant 0 : index
    %c0_1 = arith.constant 0 : index
    %3 = vector.load %arg6[%c0, %c0_1] : memref<8x128xf32, #tpu.memory_space<vmem>>, vector<8x128xf32>
    %c0_2 = arith.constant 0 : index
    %c0_3 = arith.constant 0 : index
    %4 = vector.load %arg3[%c0_2, %c0_3] : memref<8x128xf32, #tpu.memory_space<vmem>>, vector<8x128xf32>
    %c0_4 = arith.constant 0 : index
    %c0_5 = arith.constant 0 : index
    %5 = vector.load %arg4[%c0_4, %c0_5] : memref<128x128xf32, #tpu.memory_space<vmem>>, vector<128x128xf32>
    %cst = arith.constant dense<0.000000e+00> : vector<8x128xf32>
    %6 = tpu.matmul %4, %5, %cst {dimension_numbers = #tpu.dot_dimension_numbers<[1], [0], [0], [1], [0, 0, 1, 1], [], []>} : vector<8x128xf32>, vector<128x128xf32>, vector<8x128xf32> -> vector<8x128xf32>
    %7 = arith.addf %3, %6 : vector<8x128xf32>
    %c0_6 = arith.constant 0 : index
    %c0_7 = arith.constant 0 : index
    %8 = vector.load %arg6[%c0_6, %c0_7] : memref<8x128xf32, #tpu.memory_space<vmem>>, vector<8x128xf32>
    tpu.vector_store %arg6[%c0_6, %c0_7], %7 {strides = array<i32>} : memref<8x128xf32, #tpu.memory_space<vmem>>, vector<8x128xf32>,
    return
  }
  func.func @transform_0(%arg0: i32, %arg1: i32, %arg2: i32) -> (i32, i32) {
    %c0_i32 = arith.constant 0 : i32
    return %arg0, %arg2 : i32, i32
  }
  func.func @transform_1(%arg0: i32, %arg1: i32, %arg2: i32) -> (i32, i32) {
    %c0_i32 = arith.constant 0 : i32
    return %arg2, %arg1 : i32, i32
  }
  func.func @transform_2(%arg0: i32, %arg1: i32, %arg2: i32) -> (i32, i32) {
    %c0_i32 = arith.constant 0 : i32
    %c0_i32_0 = arith.constant 0 : i32
    return %c0_i32, %arg1 : i32, i32
  }
  func.func @transform_3(%arg0: i32, %arg1: i32, %arg2: i32) -> (i32, i32) {
    %c0_i32 = arith.constant 0 : i32
    return %arg0, %arg1 : i32, i32
  }
}

</mosaic_0001>

<llo_original>
// kernel: linear_map.1
$region0: #{linear_map.1}
  #allocation0 [shape = 'u32[]', space=smem, size = 0x4, offset = 0x4, fixed_abs, tag = 'smem constant byte address 0x4 - core index']
  #allocation1 [shape = 'u32[144,128]{1,0:T(1,128)}', space=vmem, size = 0x12000, scoped, tag = 'internal scratch']
  %s0 = inlined_call_operand.vmem [shape: f32[8,128], index: 0, kind: input, shape index: {}]
  %s1 = inlined_call_operand.vmem [shape: f32[128,128], index: 1, kind: input, shape index: {}]
  %s2 = inlined_call_operand.vmem [shape: f32[1,128], index: 2, kind: input, shape index: {}]
  %s3 = inlined_call_operand.hbm [shape: f32[8,128], index: 3, kind: output, shape index: {}]
  %s4 = sld [smem:[#allocation0]]
  $region26: #{linear_map.1} parent=0
    _
  %s6 = ssub.s32 1, %s4
  %s7 = scalar_select 0, %s6, %s4
  $region1: #{linear_map.1} parent=0
    #allocation2 [shape = 'u8[4096]{0}', space=vmem, size = 0x1000, scoped, tag = 'output window, operand 0, single buffered']
    #allocation3 [shape = 's32[1]{0}', space=sflag, size = 0x4, scoped, tag = 'scoped memory for linear_map.1']
    %8 = vsyncpa [#allocation3], 0
    // Predicated region
    $region2: #{linear_map.1} parent=1 // pred_check
      _
    $region3: #{linear_map.1} parent=1 // pred_check_branch
      %10 = sbr.rel (0) target = $region5
    $region4: #{linear_map.1} parent=1 // pred_region
      _
    $region5: #{linear_map.1} parent=1 // pred_fallthru
      _
    // Predicated region
    $region6: #{linear_map.1} parent=1 // pred_check
      _
    $region7: #{linear_map.1} parent=1 // pred_check_branch
      %12 = sbr.rel (0) target = $region9
    $region8: #{linear_map.1} parent=1 // pred_region
      _
    $region9: #{linear_map.1} parent=1 // pred_fallthru
      _
    // Predicated region
    $region10: #{linear_map.1} parent=1 // pred_check
      _
    $region11: #{linear_map.1} parent=1 // pred_check_branch
      %14 = sbr.rel (0) target = $region13
    $region12: #{linear_map.1} parent=1 // pred_region
      _
    $region13: #{linear_map.1} parent=1 // pred_fallthru
      _
    %p15 = scmp.eq.s32.totalorder 0, 0
    // Predicated region
    $region14: #{linear_map.1} parent=1 // pred_check
      %p16 = pneg %p15
    $region15: #{linear_map.1} parent=1 // pred_check_branch
      %18 = sbr.rel (%p16) target = $region17
    $region16: #{linear_map.1} parent=1 // pred_region
      %v19 = vld [vmem:[%s2] sm:$0x1]
      %v21 = vlaneseq
      %v22 = vshrl.u32 %v21, 7
      %v23 = vsub.s32 0, %v22
      %v24 = vrot.slane %v19, %v23
      %26 = vst [vmem:[#allocation2] sm:$0xff] %v24
    $region17: #{linear_map.1} parent=1 // pred_fallthru
      _
    %v27 = vld [vmem:[#allocation2] sm:$0xff]
    %v28 = vld [vmem:[%s0] sm:$0xff]
    %v29 = vld [vmem:[%s1] sm:$0xff]
    %v30 = vld [vmem:[%s1 + $0x8] sm:$0xff]
    %v31 = vld [vmem:[%s1 + $0x10] sm:$0xff]
    %v32 = vld [vmem:[%s1 + $0x18] sm:$0xff]
    %v33 = vld [vmem:[%s1 + $0x20] sm:$0xff]
    %v34 = vld [vmem:[%s1 + $0x28] sm:$0xff]
    %v35 = vld [vmem:[%s1 + $0x30] sm:$0xff]
    %v36 = vld [vmem:[%s1 + $0x38] sm:$0xff]
    %v37 = vld [vmem:[%s1 + $0x40] sm:$0xff]
    %v38 = vld [vmem:[%s1 + $0x48] sm:$0xff]
    %v39 = vld [vmem:[%s1 + $0x50] sm:$0xff]
    %v40 = vld [vmem:[%s1 + $0x58] sm:$0xff]
    %v41 = vld [vmem:[%s1 + $0x60] sm:$0xff]
    %v42 = vld [vmem:[%s1 + $0x68] sm:$0xff]
    %v43 = vld [vmem:[%s1 + $0x70] sm:$0xff]
    %v44 = vld [vmem:[%s1 + $0x78] sm:$0xff]
    %45 = vmatprep.subr.mxu0 0.0
    %46 = vmatpush1.msra.mxu0 %v44
    %47 = vmatprep.subr.mxu0 0.0
    %48 = vmatpush1.msra.mxu0 %v43
    %49 = vmatprep.subr.mxu0 0.0
    %50 = vmatpush1.msra.mxu0 %v42
    %51 = vmatprep.subr.mxu0 0.0
    %52 = vmatpush1.msra.mxu0 %v41
    %53 = vmatprep.subr.mxu0 0.0
    %54 = vmatpush1.msra.mxu0 %v40
    %55 = vmatprep.subr.mxu0 0.0
    %56 = vmatpush1.msra.mxu0 %v39
    %57 = vmatprep.subr.mxu0 0.0
    %58 = vmatpush1.msra.mxu0 %v38
    %59 = vmatprep.subr.mxu0 0.0
    %60 = vmatpush1.msra.mxu0 %v37
    %61 = vmatprep.subr.mxu0 0.0
    %62 = vmatpush1.msra.mxu0 %v36
    %63 = vmatprep.subr.mxu0 0.0
    %64 = vmatpush1.msra.mxu0 %v35
    %65 = vmatprep.subr.mxu0 0.0
    %66 = vmatpush1.msra.mxu0 %v34
    %67 = vmatprep.subr.mxu0 0.0
    %68 = vmatpush1.msra.mxu0 %v33
    %69 = vmatprep.subr.mxu0 0.0
    %70 = vmatpush1.msra.mxu0 %v32
    %71 = vmatprep.subr.mxu0 0.0
    %72 = vmatpush1.msra.mxu0 %v31
    %73 = vmatprep.subr.mxu0 0.0
    %74 = vmatpush1.msra.mxu0 %v30
    %75 = vmatprep.subr.mxu0 0.0
    %76 = vmatpush1.msra.mxu0 %v29
    %77 = vmatprep.subr.mxu0 0.0
    %78 = vmatpush2.msra.mxu0 0.0
    %79 = vmatprep.subr.mxu0 0.0
    %80 = vmatpush2.msra.mxu0 0.0
    %81 = vmatprep.subr.mxu0 0.0
    %82 = vmatpush2.msra.mxu0 0.0
    %83 = vmatprep.subr.mxu0 0.0
    %84 = vmatpush2.msra.mxu0 0.0
    %85 = vmatprep.subr.mxu0 0.0
    %86 = vmatpush2.msra.mxu0 0.0
    %87 = vmatprep.subr.mxu0 0.0
    %88 = vmatpush2.msra.mxu0 0.0
    %89 = vmatprep.subr.mxu0 0.0
    %90 = vmatpush2.msra.mxu0 0.0
    %91 = vmatprep.subr.mxu0 0.0
    %92 = vmatpush2.msra.mxu0 0.0
    %93 = vmatprep.subr.mxu0 0.0
    %94 = vmatpush2.msra.mxu0 0.0
    %95 = vmatprep.subr.mxu0 0.0
    %96 = vmatpush2.msra.mxu0 0.0
    %97 = vmatprep.subr.mxu0 0.0
    %98 = vmatpush2.msra.mxu0 0.0
    %99 = vmatprep.subr.mxu0 0.0
    %100 = vmatpush2.msra.mxu0 0.0
    %101 = vmatprep.subr.mxu0 0.0
    %102 = vmatpush2.msra.mxu0 0.0
    %103 = vmatprep.subr.mxu0 0.0
    %104 = vmatpush2.msra.mxu0 0.0
    %105 = vmatprep.subr.mxu0 0.0
    %106 = vmatpush2.msra.mxu0 0.0
    %107 = vmatprep.subr.mxu0 0.0
    %108 = vmatpush2.msra.mxu0 0.0
    %109 = vmatprep.mubr.f32.mxu0 0.0
    %110 = vmatmul.mubr.f32.gmra.mxu0 %v28
    %v111 = vpop.f32.mrf.mxu0
    %v112 = vadd.f32 0.0, %v111
    %v113 = vpop.f32.mrf.mxu0
    %114 = vdwg.mxu0
    %v115 = vadd.f32 %v27, %v112
    %116 = vst [vmem:[#allocation2] sm:$0xff] %v115
    // Predicated region
    $region18: #{linear_map.1} parent=1 // pred_check
      _
    $region19: #{linear_map.1} parent=1 // pred_check_branch
      %118 = sbr.rel (0) target = $region21
    $region20: #{linear_map.1} parent=1 // pred_region
      %s120 = ssub.s32 128, 128
      %121 = vsyncadd [#allocation3], %s120
      %s123 = sshll.u32 [#allocation2], 4
      %s124 = int_to_ptr.vmem [resolvable:$true] %s123
      %126 = dma.vmem_to_hbm [thread:$0]  %s124, 128, %s3, [#allocation3]
    $region21: #{linear_map.1} parent=1 // pred_fallthru
      _
    // Predicated region
    $region22: #{linear_map.1} parent=1 // pred_check
      _
    $region23: #{linear_map.1} parent=1 // pred_check_branch
      %128 = sbr.rel (0) target = $region25
    $region24: #{linear_map.1} parent=1 // pred_region
      %129 = dma.done [#allocation3], 128
    $region25: #{linear_map.1} parent=1 // pred_fallthru
      _
    %130 = vsyncpa [#allocation3], 1

</llo_original>
